<compile_context>
chip_gen: v7x
topology: tpu7x:2x2x1
jax: 0.10.0
libtpu: 0.0.40
codegen_flags: <defaults>
</compile_context>

<pallas_src>
import functools
import math

import jax
import jax.numpy as jnp
from jax import lax
from jax.experimental import pallas as pl
from jax.experimental.pallas import tpu as pltpu


def _round_up(x, m):
    return ((x + m - 1) // m) * m


def _make_fused_kernel(S, D, A, na1, na2, na3, H1, H2, H3):
    """Per-tile kernel; batch lives in the lane (last) dimension."""
    # static offsets into the packed bias slab [NB, 1]
    o1 = 0
    o2 = o1 + H1
    o3 = o2 + H2
    o4 = o3 + H3
    o5 = o4 + A

    def kernel(x_ref, w1_ref, w2_ref, w3_ref, w4_ref, wfin_ref, b_ref, out_ref):
        f32 = jnp.float32
        bf16 = jnp.bfloat16

        x = x_ref[...]                      # [F, TB] f32  (state | des | action)
        xb = x.astype(bf16)

        b1 = b_ref[o1:o2, :]
        b2 = b_ref[o2:o3, :]
        b3 = b_ref[o3:o4, :]
        b4 = b_ref[o4:o5, :]
        bfin = b_ref[o5:o5 + 2, :]

        # layer 1 (fused [actor | critic]); ReLU rows < na1, Tanh otherwise
        h1 = jnp.dot(w1_ref[...], xb, preferred_element_type=f32) + b1
        r1 = lax.broadcasted_iota(jnp.int32, h1.shape, 0)
        a1 = jnp.where(r1 < na1, jnp.maximum(h1, 0.0), jnp.tanh(h1))

        # layer 2 (block diagonal [24->48 | 64->64])
        h2 = jnp.dot(w2_ref[...], a1.astype(bf16), preferred_element_type=f32) + b2
        r2 = lax.broadcasted_iota(jnp.int32, h2.shape, 0)
        a2 = jnp.where(r2 < na2, jnp.maximum(h2, 0.0), jnp.tanh(h2))

        # layer 3 (block diagonal [48->24 | 64->1]); the critic value row is linear
        h3 = jnp.dot(w3_ref[...], a2.astype(bf16), preferred_element_type=f32) + b3
        r3 = lax.broadcasted_iota(jnp.int32, h3.shape, 0)
        a3 = jnp.where(r3 < na3, jnp.maximum(h3, 0.0), h3)

        # actor head -> action mean (critic column of w4 is zero)
        mean = jnp.dot(w4_ref[...], a3.astype(bf16), preferred_element_type=f32) + b4
        value = a3[na3:na3 + 1, :]          # critic value row, kept in f32

        # diagonal-Gaussian log_prob quadratic form (kept f32) + value, packed [2, TB]
        act = x[S + D:S + D + A, :]         # action slice of the single input stream
        diff = act - mean
        dsq = diff * diff
        z = jnp.concatenate([dsq, value], axis=0)                       # [A+1, TB]
        packed = jnp.dot(wfin_ref[...], z, preferred_element_type=f32) + bfin
        out_ref[...] = packed.astype(out_ref.dtype)

    return kernel


def prepare_actor_critic(params, action_var, state_dim, action_dim):
    """One-time fusion of the (PyTorch-layout) weights into kernel operands.

    Returns (fused_arrays_dict, static_dims_tuple).  Call once per parameter
    update, not per evaluate() call.
    """
    f32 = jnp.float32
    bf16 = jnp.bfloat16
    S, A, D = state_dim, action_dim, 2

    aw1, ab1 = params["aw1"], params["ab1"]
    aw2, ab2 = params["aw2"], params["ab2"]
    aw3, ab3 = params["aw3"], params["ab3"]
    aw4, ab4 = params["aw4"], params["ab4"]
    cw1, cb1 = params["cw1"], params["cb1"]
    cw2, cb2 = params["cw2"], params["cb2"]
    cw3, cb3 = params["cw3"], params["cb3"]

    na1, nc1 = aw1.shape[1], cw1.shape[1]          # 24, 64
    na2, nc2 = aw2.shape[1], cw2.shape[1]          # 48, 64
    na3, nc3 = aw3.shape[1], cw3.shape[1]          # 24, 1
    H1, H2, H3 = na1 + nc1, na2 + nc2, na3 + nc3   # 88, 112, 25
    F = S + D + A

    # W1 [H1, F]: actor rows read (state|des) cols, critic rows read state cols;
    # the trailing action columns are zero (action rides in the same stream).
    w1 = jnp.zeros((H1, F), f32).at[:na1, :S + D].set(aw1.T).at[na1:, :S].set(cw1.T)
    w2 = jnp.zeros((H2, H1), f32).at[:na2, :na1].set(aw2.T).at[na2:, na1:].set(cw2.T)
    w3 = jnp.zeros((H3, H2), f32).at[:na3, :na2].set(aw3.T).at[na3:, na2:].set(cw3.T)
    w4 = jnp.zeros((A, H3), f32).at[:, :na3].set(aw4.T)     # critic column stays zero

    b1 = jnp.concatenate([ab1, cb1], axis=1).T.astype(f32)  # [H1, 1]
    b2 = jnp.concatenate([ab2, cb2], axis=1).T.astype(f32)  # [H2, 1]
    b3 = jnp.concatenate([ab3, cb3], axis=1).T.astype(f32)  # [H3, 1]
    b4 = ab4.T.astype(f32)                                  # [A, 1]

    # hoisted distribution constants (no per-tile log / reciprocal / reduce)
    var = action_var.astype(f32)
    sum_log_var = jnp.sum(jnp.log(var))
    logp_const = -0.5 * (A * math.log(2.0 * math.pi) + sum_log_var)
    ent_scalar = 0.5 * A * (1.0 + math.log(2.0 * math.pi)) + 0.5 * sum_log_var

    # finisher [2, A+1]: row0 = quadratic-form weights, row1 = value passthrough
    wfin = jnp.zeros((2, A + 1), f32).at[0, :A].set(-0.5 / var).at[1, A].set(1.0)
    bfin = jnp.stack([logp_const, jnp.asarray(0.0, f32)]).reshape(2, 1)

    b_all = jnp.concatenate([b1, b2, b3, b4, bfin], axis=0).astype(f32)

    fused = dict(
        w1=w1.astype(bf16), w2=w2.astype(bf16), w3=w3.astype(bf16),
        w4=w4.astype(bf16), wfin=wfin, b_all=b_all,
        ent=jnp.asarray(ent_scalar, f32),
    )
    dims = (S, D, A, na1, na2, na3, H1, H2, H3)
    return fused, dims


@functools.partial(jax.jit, static_argnames=("dims", "block_b"))
def actor_critic_evaluate(state, action, des_pt, fused, dims, *, block_b=2048):
    """Pallas-backed equivalent of ActorCritic.evaluate().

    Returns (action_logprobs [B], state_values [B,1], dist_entropy [B]).
    """
    f32 = jnp.float32
    S, D, A, na1, na2, na3, H1, H2, H3 = dims
    B = state.shape[0]
    F = S + D + A

    # single lane-dense batch stream: [feat, B] = [state | des | action].T
    x = jnp.concatenate([state, des_pt, action], axis=1).astype(f32).T     # [F, B]

    # batch tile: full batch when small, otherwise a multiple of 128 lanes;
    # keep >= 2 grid steps when B > 128 so "parallel" shards across v7x's 2 TCs.
    if B <= 128:
        TB = B
    else:
        TB = max(128, (min(block_b, B) // 128) * 128)
        TB = min(TB, max(128, _round_up(pl.cdiv(B, 2), 128)))
    grid = (pl.cdiv(B, TB),)

    kernel = _make_fused_kernel(S, D, A, na1, na2, na3, H1, H2, H3)

    weights = [fused["w1"], fused["w2"], fused["w3"], fused["w4"],
               fused["wfin"], fused["b_all"]]

    def const_spec(w):  # full-array block, constant index map -> VMEM-resident
        return pl.BlockSpec(w.shape, lambda i: (0, 0))

    packed = pl.pallas_call(
        kernel,
        out_shape=jax.ShapeDtypeStruct((2, B), f32),
        grid=grid,
        in_specs=[pl.BlockSpec((F, TB), lambda i: (0, i))]
                 + [const_spec(w) for w in weights],
        out_specs=pl.BlockSpec((2, TB), lambda i: (0, i)),
        compiler_params=pltpu.CompilerParams(
            dimension_semantics=("parallel",)),
    )(x, *weights)

    logp = packed[0, :]
    values = packed[1, :][:, None]
    entropy = jnp.broadcast_to(fused["ent"], (B,))
    return logp, values, entropy


def init_params(key, state_dim, action_dim):
    """Deterministic synthetic weights (PyTorch-Linear shapes, stored as [in, out])."""
    dims_actor = [(state_dim + 2, 24), (24, 48), (48, 24), (24, action_dim)]
    dims_critic = [(state_dim, 64), (64, 64), (64, 1)]
    params = {}
    keys = jax.random.split(key, len(dims_actor) + len(dims_critic))
    for i, (din, dout) in enumerate(dims_actor):
        kw, kb = jax.random.split(keys[i])
        bound = 1.0 / math.sqrt(din)
        params[f"aw{i+1}"] = jax.random.uniform(kw, (din, dout), jnp.float32, -bound, bound)
        params[f"ab{i+1}"] = jax.random.uniform(kb, (1, dout), jnp.float32, -bound, bound)
    for i, (din, dout) in enumerate(dims_critic):
        kw, kb = jax.random.split(keys[len(dims_actor) + i])
        bound = 1.0 / math.sqrt(din)
        params[f"cw{i+1}"] = jax.random.uniform(kw, (din, dout), jnp.float32, -bound, bound)
        params[f"cb{i+1}"] = jax.random.uniform(kb, (1, dout), jnp.float32, -bound, bound)
    return params


def reference_evaluate(state, action, des_pt, params, action_var):
    """Pure-JAX (unfused, f32) reference of ActorCritic.evaluate()."""
    x = jnp.concatenate([state, des_pt], axis=1)
    h = jax.nn.relu(x @ params["aw1"] + params["ab1"])
    h = jax.nn.relu(h @ params["aw2"] + params["ab2"])
    h = jax.nn.relu(h @ params["aw3"] + params["ab3"])
    mean = h @ params["aw4"] + params["ab4"]
    A = mean.shape[-1]
    diff = action - mean
    quad = jnp.sum(diff * diff / action_var[None, :], axis=-1)
    sum_log_var = jnp.sum(jnp.log(action_var))
    logp = -0.5 * (quad + A * math.log(2 * math.pi)) - 0.5 * sum_log_var
    ent = jnp.full((state.shape[0],),
                   0.5 * A * (1.0 + math.log(2 * math.pi)) + 0.5 * sum_log_var)
    c = jnp.tanh(state @ params["cw1"] + params["cb1"])
    c = jnp.tanh(c @ params["cw2"] + params["cb2"])
    val = c @ params["cw3"] + params["cb3"]
    return logp, val, ent


def _check(name, got, ref, rtol, atol):
    assert jnp.allclose(got, ref, rtol=rtol, atol=atol), f"{name} mismatch"


if __name__ == "__main__":
    state_dim, action_dim = 8, 4
    action_std_init = 0.6

    key = jax.random.PRNGKey(0)
    k_p, k_data = jax.random.split(key)
    params = init_params(k_p, state_dim, action_dim)
    action_var = jnp.full((action_dim,), action_std_init * action_std_init, jnp.float32)

    # fused weights / constants built ONCE (hoisted out of the per-call path)
    fused, dims = prepare_actor_critic(params, action_var, state_dim, action_dim)
    fused = jax.tree_util.tree_map(jax.block_until_ready, fused)

    # bf16 MXU operands -> compare against the f32 reference with loosened tolerances
    LOGP_TOL = dict(rtol=2e-2, atol=5e-2)
    VAL_TOL = dict(rtol=2e-2, atol=2e-2)

    def run_case(seed, B):
        ks, kd, ka = jax.random.split(jax.random.PRNGKey(seed), 3)
        st = jax.random.normal(ks, (B, state_dim), jnp.float32)
        de = jax.random.normal(kd, (B, 2), jnp.float32)
        ac = jax.random.normal(ka, (B, action_dim), jnp.float32)
        lp, vl, en = actor_critic_evaluate(st, ac, de, fused, dims)
        jax.block_until_ready((lp, vl, en))
        rl, rv, re = reference_evaluate(st, ac, de, params, action_var)
        _check("log_prob", lp, rl, **LOGP_TOL)
        _check("state value", vl, rv, **VAL_TOL)
        _check("entropy", en, re, rtol=0.0, atol=1e-5)

    run_case(0, 8)     # tiny batch, single full block
    run_case(1, 20)    # non-multiple-of-8 batch, single full block (no padding copy)
    run_case(2, 300)   # multi-step grid (2 tiles) + ragged last block, no wrapper pad

    print("KERNEL_OK")
</pallas_src>

<mosaic_0001>
module attributes {stable_mosaic.version = 11 : i64} {
  func.func @kernel(%arg0: i32, %arg1: memref<14x8xf32, #tpu.memory_space<vmem>>, %arg2: memref<88x14xbf16, #tpu.memory_space<vmem>>, %arg3: memref<112x88xbf16, #tpu.memory_space<vmem>>, %arg4: memref<25x112xbf16, #tpu.memory_space<vmem>>, %arg5: memref<4x25xbf16, #tpu.memory_space<vmem>>, %arg6: memref<2x5xf32, #tpu.memory_space<vmem>>, %arg7: memref<231x1xf32, #tpu.memory_space<vmem>>, %arg8: memref<2x8xf32, #tpu.memory_space<vmem>>) attributes {dimension_semantics = [#tpu.dimension_semantics<parallel>], iteration_bounds = array<i64: 1>, scalar_prefetch = 0 : i64, scratch_operands = 0 : i64, tpu.core_type = #tpu.core_type<tc>, window_params = [{transform_indices = @transform_0, window_bounds = array<i64: 14, 8>}, {pipeline_mode = #tpu.pipeline_mode<synchronous>, transform_indices = @transform_1, window_bounds = array<i64: 88, 14>}, {pipeline_mode = #tpu.pipeline_mode<synchronous>, transform_indices = @transform_2, window_bounds = array<i64: 112, 88>}, {pipeline_mode = #tpu.pipeline_mode<synchronous>, transform_indices = @transform_3, window_bounds = array<i64: 25, 112>}, {pipeline_mode = #tpu.pipeline_mode<synchronous>, transform_indices = @transform_4, window_bounds = array<i64: 4, 25>}, {pipeline_mode = #tpu.pipeline_mode<synchronous>, transform_indices = @transform_5, window_bounds = array<i64: 2, 5>}, {pipeline_mode = #tpu.pipeline_mode<synchronous>, transform_indices = @transform_6, window_bounds = array<i64: 231, 1>}, {transform_indices = @transform_7, window_bounds = array<i64: 2, 8>}]} {
    %c0 = arith.constant 0 : index
    %c0_0 = arith.constant 0 : index
    %0 = vector.load %arg1[%c0, %c0_0] : memref<14x8xf32, #tpu.memory_space<vmem>>, vector<14x8xf32>
    %1 = arith.truncf %0 : vector<14x8xf32> to vector<14x8xbf16>
    %c0_1 = arith.constant 0 : index
    %c0_2 = arith.constant 0 : index
    %2 = vector.load %arg7[%c0_1, %c0_2] : memref<231x1xf32, #tpu.memory_space<vmem>>, vector<88x1xf32>
    %c88 = arith.constant 88 : index
    %c0_3 = arith.constant 0 : index
    %3 = vector.load %arg7[%c88, %c0_3] : memref<231x1xf32, #tpu.memory_space<vmem>>, vector<112x1xf32>
    %c200 = arith.constant 200 : index
    %c0_4 = arith.constant 0 : index
    %4 = vector.load %arg7[%c200, %c0_4] : memref<231x1xf32, #tpu.memory_space<vmem>>, vector<25x1xf32>
    %c225 = arith.constant 225 : index
    %c0_5 = arith.constant 0 : index
    %5 = vector.load %arg7[%c225, %c0_5] : memref<231x1xf32, #tpu.memory_space<vmem>>, vector<4x1xf32>
    %c229 = arith.constant 229 : index
    %c0_6 = arith.constant 0 : index
    %6 = vector.load %arg7[%c229, %c0_6] : memref<231x1xf32, #tpu.memory_space<vmem>>, vector<2x1xf32>
    %c0_7 = arith.constant 0 : index
    %c0_8 = arith.constant 0 : index
    %7 = vector.load %arg2[%c0_7, %c0_8] : memref<88x14xbf16, #tpu.memory_space<vmem>>, vector<88x14xbf16>
    %cst = arith.constant dense<0.000000e+00> : vector<88x8xf32>
    %8 = tpu.matmul %7, %1, %cst {dimension_numbers = #tpu.dot_dimension_numbers<[1], [0], [0], [1], [0, 0, 1, 1], [], []>} : vector<88x14xbf16>, vector<14x8xbf16>, vector<88x8xf32> -> vector<88x8xf32>
    %9 = vector.broadcast %2 : vector<88x1xf32> to vector<88x8xf32>
    %10 = arith.addf %8, %9 : vector<88x8xf32>
    %11 = tpu.iota {dimensions = array<i32: 0>} : vector<88x8xi32>
    %c24_i32 = arith.constant 24 : i32
    %12 = vector.broadcast %c24_i32 : i32 to vector<88x8xi32>
    %13 = arith.cmpi slt, %11, %12 : vector<88x8xi32>
    %cst_9 = arith.constant 0.000000e+00 : f32
    %14 = vector.broadcast %cst_9 : f32 to vector<88x8xf32>
    %15 = arith.maximumf %10, %14 : vector<88x8xf32>
    %16 = math.tanh %10 : vector<88x8xf32>
    %17 = arith.select %13, %15, %16 : vector<88x8xi1>, vector<88x8xf32>
    %c0_10 = arith.constant 0 : index
    %c0_11 = arith.constant 0 : index
    %18 = vector.load %arg3[%c0_10, %c0_11] : memref<112x88xbf16, #tpu.memory_space<vmem>>, vector<112x88xbf16>
    %19 = arith.truncf %17 : vector<88x8xf32> to vector<88x8xbf16>
    %cst_12 = arith.constant dense<0.000000e+00> : vector<112x8xf32>
    %20 = tpu.matmul %18, %19, %cst_12 {dimension_numbers = #tpu.dot_dimension_numbers<[1], [0], [0], [1], [0, 0, 1, 1], [], []>} : vector<112x88xbf16>, vector<88x8xbf16>, vector<112x8xf32> -> vector<112x8xf32>
    %21 = vector.broadcast %3 : vector<112x1xf32> to vector<112x8xf32>
    %22 = arith.addf %20, %21 : vector<112x8xf32>
    %23 = tpu.iota {dimensions = array<i32: 0>} : vector<112x8xi32>
    %c48_i32 = arith.constant 48 : i32
    %24 = vector.broadcast %c48_i32 : i32 to vector<112x8xi32>
    %25 = arith.cmpi slt, %23, %24 : vector<112x8xi32>
    %cst_13 = arith.constant 0.000000e+00 : f32
    %26 = vector.broadcast %cst_13 : f32 to vector<112x8xf32>
    %27 = arith.maximumf %22, %26 : vector<112x8xf32>
    %28 = math.tanh %22 : vector<112x8xf32>
    %29 = arith.select %25, %27, %28 : vector<112x8xi1>, vector<112x8xf32>
    %c0_14 = arith.constant 0 : index
    %c0_15 = arith.constant 0 : index
    %30 = vector.load %arg4[%c0_14, %c0_15] : memref<25x112xbf16, #tpu.memory_space<vmem>>, vector<25x112xbf16>
    %31 = arith.truncf %29 : vector<112x8xf32> to vector<112x8xbf16>
    %cst_16 = arith.constant dense<0.000000e+00> : vector<25x8xf32>
    %32 = tpu.matmul %30, %31, %cst_16 {dimension_numbers = #tpu.dot_dimension_numbers<[1], [0], [0], [1], [0, 0, 1, 1], [], []>} : vector<25x112xbf16>, vector<112x8xbf16>, vector<25x8xf32> -> vector<25x8xf32>
    %33 = vector.broadcast %4 : vector<25x1xf32> to vector<25x8xf32>
    %34 = arith.addf %32, %33 : vector<25x8xf32>
    %35 = tpu.iota {dimensions = array<i32: 0>} : vector<25x8xi32>
    %c24_i32_17 = arith.constant 24 : i32
    %36 = vector.broadcast %c24_i32_17 : i32 to vector<25x8xi32>
    %37 = arith.cmpi slt, %35, %36 : vector<25x8xi32>
    %cst_18 = arith.constant 0.000000e+00 : f32
    %38 = vector.broadcast %cst_18 : f32 to vector<25x8xf32>
    %39 = arith.maximumf %34, %38 : vector<25x8xf32>
    %40 = arith.select %37, %39, %34 : vector<25x8xi1>, vector<25x8xf32>
    %c0_19 = arith.constant 0 : index
    %c0_20 = arith.constant 0 : index
    %41 = vector.load %arg5[%c0_19, %c0_20] : memref<4x25xbf16, #tpu.memory_space<vmem>>, vector<4x25xbf16>
    %42 = arith.truncf %40 : vector<25x8xf32> to vector<25x8xbf16>
    %cst_21 = arith.constant dense<0.000000e+00> : vector<4x8xf32>
    %43 = tpu.matmul %41, %42, %cst_21 {dimension_numbers = #tpu.dot_dimension_numbers<[1], [0], [0], [1], [0, 0, 1, 1], [], []>} : vector<4x25xbf16>, vector<25x8xbf16>, vector<4x8xf32> -> vector<4x8xf32>
    %44 = vector.broadcast %5 : vector<4x1xf32> to vector<4x8xf32>
    %45 = arith.addf %43, %44 : vector<4x8xf32>
    %46 = vector.extract_strided_slice %40 {offsets = [24, 0], sizes = [1, 8], strides = [1, 1]} : vector<25x8xf32> to vector<1x8xf32>
    %47 = vector.extract_strided_slice %0 {offsets = [10, 0], sizes = [4, 8], strides = [1, 1]} : vector<14x8xf32> to vector<4x8xf32>
    %48 = arith.subf %47, %45 : vector<4x8xf32>
    %49 = arith.mulf %48, %48 : vector<4x8xf32>
    %50 = tpu.concatenate %49, %46 in 0 : vector<4x8xf32>, vector<1x8xf32> -> vector<5x8xf32>
    %c0_22 = arith.constant 0 : index
    %c0_23 = arith.constant 0 : index
    %51 = vector.load %arg6[%c0_22, %c0_23] : memref<2x5xf32, #tpu.memory_space<vmem>>, vector<2x5xf32>
    %cst_24 = arith.constant dense<0.000000e+00> : vector<2x8xf32>
    %52 = tpu.matmul %51, %50, %cst_24 {dimension_numbers = #tpu.dot_dimension_numbers<[1], [0], [0], [1], [0, 0, 1, 1], [], []>} : vector<2x5xf32>, vector<5x8xf32>, vector<2x8xf32> -> vector<2x8xf32>
    %53 = vector.broadcast %6 : vector<2x1xf32> to vector<2x8xf32>
    %54 = arith.addf %52, %53 : vector<2x8xf32>
    %c0_25 = arith.constant 0 : index
    %c0_26 = arith.constant 0 : index
    %55 = vector.load %arg8[%c0_25, %c0_26] : memref<2x8xf32, #tpu.memory_space<vmem>>, vector<2x8xf32>
    tpu.vector_store %arg8[%c0_25, %c0_26], %54 {strides = array<i32>} : memref<2x8xf32, #tpu.memory_space<vmem>>, vector<2x8xf32>,
    return
  }
  func.func @transform_0(%arg0: i32) -> (i32, i32) {
    %c0_i32 = arith.constant 0 : i32
    %c0_i32_0 = arith.constant 0 : i32
    return %c0_i32, %arg0 : i32, i32
  }
  func.func @transform_1(%arg0: i32) -> (i32, i32) {
    %c0_i32 = arith.constant 0 : i32
    %c0_i32_0 = arith.constant 0 : i32
    %c0_i32_1 = arith.constant 0 : i32
    return %c0_i32, %c0_i32_0 : i32, i32
  }
  func.func @transform_2(%arg0: i32) -> (i32, i32) {
    %c0_i32 = arith.constant 0 : i32
    %c0_i32_0 = arith.constant 0 : i32
    %c0_i32_1 = arith.constant 0 : i32
    return %c0_i32, %c0_i32_0 : i32, i32
  }
  func.func @transform_3(%arg0: i32) -> (i32, i32) {
    %c0_i32 = arith.constant 0 : i32
    %c0_i32_0 = arith.constant 0 : i32
    %c0_i32_1 = arith.constant 0 : i32
    return %c0_i32, %c0_i32_0 : i32, i32
  }
  func.func @transform_4(%arg0: i32) -> (i32, i32) {
    %c0_i32 = arith.constant 0 : i32
    %c0_i32_0 = arith.constant 0 : i32
    %c0_i32_1 = arith.constant 0 : i32
    return %c0_i32, %c0_i32_0 : i32, i32
  }
  func.func @transform_5(%arg0: i32) -> (i32, i32) {
    %c0_i32 = arith.constant 0 : i32
    %c0_i32_0 = arith.constant 0 : i32
    %c0_i32_1 = arith.constant 0 : i32
    return %c0_i32, %c0_i32_0 : i32, i32
  }
  func.func @transform_6(%arg0: i32) -> (i32, i32) {
    %c0_i32 = arith.constant 0 : i32
    %c0_i32_0 = arith.constant 0 : i32
    %c0_i32_1 = arith.constant 0 : i32
    return %c0_i32, %c0_i32_0 : i32, i32
  }
  func.func @transform_7(%arg0: i32) -> (i32, i32) {
    %c0_i32 = arith.constant 0 : i32
    %c0_i32_0 = arith.constant 0 : i32
    return %c0_i32, %arg0 : i32, i32
  }
}

</mosaic_0001>

<llo_original>
// kernel: actor_critic_evaluate.1
$region0: #{actor_critic_evaluate.1}
  #allocation0 [shape = 'u32[]', space=smem, size = 0x4, offset = 0x4, fixed_abs, tag = 'smem constant byte address 0x4 - core index']
  #allocation1 [shape = 'u32[144,128]{1,0:T(1,128)}', space=vmem, size = 0x12000, scoped, tag = 'internal scratch']
  %s0 = inlined_call_operand.vmem [shape: f32[14,8], index: 0, kind: input, shape index: {}]
  %s1 = inlined_call_operand.vmem [shape: bf16[88,14], index: 1, kind: input, shape index: {}]
  %s2 = inlined_call_operand.vmem [shape: bf16[112,88], index: 2, kind: input, shape index: {}]
  %s3 = inlined_call_operand.vmem [shape: bf16[25,112], index: 3, kind: input, shape index: {}]
  %s4 = inlined_call_operand.vmem [shape: bf16[4,25], index: 4, kind: input, shape index: {}]
  %s5 = inlined_call_operand.vmem [shape: f32[2,5], index: 5, kind: input, shape index: {}]
  %s6 = inlined_call_operand.vmem [shape: f32[231,1], index: 6, kind: input, shape index: {}]
  %s7 = inlined_call_operand.vmem [shape: f32[2,8], index: 7, kind: output, shape index: {}]
  %s8 = sld [smem:[#allocation0]]
  $region38: #{actor_critic_evaluate.1} parent=0
    _
  %s10 = ssub.s32 1, %s8
  %s11 = scalar_select 0, %s10, %s8
  // Predicated region
  $region2: #{actor_critic_evaluate.1} parent=0 // pred_check
    _
  $region3: #{actor_critic_evaluate.1} parent=0 // pred_check_branch
    %13 = sbr.rel (0) target = $region5
  $region4: #{actor_critic_evaluate.1} parent=0 // pred_region
    _
  $region5: #{actor_critic_evaluate.1} parent=0 // pred_fallthru
    _
  // Predicated region
  $region6: #{actor_critic_evaluate.1} parent=0 // pred_check
    _
  $region7: #{actor_critic_evaluate.1} parent=0 // pred_check_branch
    %15 = sbr.rel (0) target = $region9
  $region8: #{actor_critic_evaluate.1} parent=0 // pred_region
    _
  $region9: #{actor_critic_evaluate.1} parent=0 // pred_fallthru
    _
  // Predicated region
  $region10: #{actor_critic_evaluate.1} parent=0 // pred_check
    _
  $region11: #{actor_critic_evaluate.1} parent=0 // pred_check_branch
    %17 = sbr.rel (0) target = $region13
  $region12: #{actor_critic_evaluate.1} parent=0 // pred_region
    _
  $region13: #{actor_critic_evaluate.1} parent=0 // pred_fallthru
    _
  // Predicated region
  $region14: #{actor_critic_evaluate.1} parent=0 // pred_check
    _
  $region15: #{actor_critic_evaluate.1} parent=0 // pred_check_branch
    %19 = sbr.rel (0) target = $region17
  $region16: #{actor_critic_evaluate.1} parent=0 // pred_region
    _
  $region17: #{actor_critic_evaluate.1} parent=0 // pred_fallthru
    _
  // Predicated region
  $region18: #{actor_critic_evaluate.1} parent=0 // pred_check
    _
  $region19: #{actor_critic_evaluate.1} parent=0 // pred_check_branch
    %21 = sbr.rel (0) target = $region21
  $region20: #{actor_critic_evaluate.1} parent=0 // pred_region
    _
  $region21: #{actor_critic_evaluate.1} parent=0 // pred_fallthru
    _
  // Predicated region
  $region22: #{actor_critic_evaluate.1} parent=0 // pred_check
    _
  $region23: #{actor_critic_evaluate.1} parent=0 // pred_check_branch
    %23 = sbr.rel (0) target = $region25
  $region24: #{actor_critic_evaluate.1} parent=0 // pred_region
    _
  $region25: #{actor_critic_evaluate.1} parent=0 // pred_fallthru
    _
  // Predicated region
  $region26: #{actor_critic_evaluate.1} parent=0 // pred_check
    _
  $region27: #{actor_critic_evaluate.1} parent=0 // pred_check_branch
    %25 = sbr.rel (0) target = $region29
  $region28: #{actor_critic_evaluate.1} parent=0 // pred_region
    _
  $region29: #{actor_critic_evaluate.1} parent=0 // pred_fallthru
    _
  %v27 = vld [vmem:[%s0] sm:$0xff]
  %v28 = vld [vmem:[%s0 + $0x8] sm:$0x3f]
  %v29 = vpack.c.bf16 %v28, %v27
  %v30 = vld [vmem:[%s6] sm:$0xff]
  %v31 = vld [vmem:[%s6 + $0x8] sm:$0xff]
  %v32 = vld [vmem:[%s6 + $0x10] sm:$0xff]
  %v33 = vld [vmem:[%s6 + $0x18] sm:$0xff]
  %v34 = vld [vmem:[%s6 + $0x20] sm:$0xff]
  %v35 = vld [vmem:[%s6 + $0x28] sm:$0xff]
  %v36 = vld [vmem:[%s6 + $0x30] sm:$0xff]
  %v37 = vld [vmem:[%s6 + $0x38] sm:$0xff]
  %v38 = vld [vmem:[%s6 + $0x40] sm:$0xff]
  %v39 = vld [vmem:[%s6 + $0x48] sm:$0xff]
  %v40 = vld [vmem:[%s6 + $0x50] sm:$0xff]
  %v41 = vld [vmem:[%s6 + $0x58] sm:$0xff]
  %v42 = vld [vmem:[%s6 + $0x60] sm:$0xff]
  %v43 = vld [vmem:[%s6 + $0x68] sm:$0xff]
  %v44 = vld [vmem:[%s6 + $0x70] sm:$0xff]
  %v45 = vld [vmem:[%s6 + $0x78] sm:$0xff]
  %v46 = vld [vmem:[%s6 + $0x80] sm:$0xff]
  %v47 = vld [vmem:[%s6 + $0x88] sm:$0xff]
  %v48 = vld [vmem:[%s6 + $0x90] sm:$0xff]
  %v49 = vld [vmem:[%s6 + $0x98] sm:$0xff]
  %v50 = vld [vmem:[%s6 + $0xa0] sm:$0xff]
  %v51 = vld [vmem:[%s6 + $0xa8] sm:$0xff]
  %v52 = vld [vmem:[%s6 + $0xb0] sm:$0xff]
  %v53 = vld [vmem:[%s6 + $0xb8] sm:$0xff]
  %v54 = vld [vmem:[%s6 + $0xc0] sm:$0xff]
  %v55 = vld [vmem:[%s6 + $0xc8] sm:$0xff]
  %v56 = vld [vmem:[%s6 + $0xd0] sm:$0xff]
  %v57 = vld [vmem:[%s6 + $0xd8] sm:$0xff]
  %v58 = vld [vmem:[%s6 + $0xe0] sm:$0x1]
  %v59 = vld [vmem:[%s6 + $0xe1] sm:$0xf]
  %v60 = vld [vmem:[%s6 + $0xe5] sm:$0x3]
  %v61 = vld [vmem:[%s1] sm:$0xf]
  %v62 = vld [vmem:[%s1 + $0x4] sm:$0xf]
  %v63 = vld [vmem:[%s1 + $0x8] sm:$0xf]
  %v64 = vld [vmem:[%s1 + $0xc] sm:$0xf]
  %v65 = vld [vmem:[%s1 + $0x10] sm:$0xf]
  %v66 = vld [vmem:[%s1 + $0x14] sm:$0xf]
  %v67 = vld [vmem:[%s1 + $0x18] sm:$0xf]
  %v68 = vld [vmem:[%s1 + $0x1c] sm:$0xf]
  %v69 = vld [vmem:[%s1 + $0x20] sm:$0xf]
  %v70 = vld [vmem:[%s1 + $0x24] sm:$0xf]
  %v71 = vld [vmem:[%s1 + $0x28] sm:$0xf]
  %73 = vset.pattern.permute.xlu0 0
  %74 = vperm.xlu0 %73, %v30
  %v75 = vpop.permute.xlu0 %74
  %78 = vset.pattern.permute.xlu0 0
  %79 = vperm.xlu0 %78, %v31
  %v80 = vpop.permute.xlu0 %79
  %83 = vset.pattern.permute.xlu0 0
  %84 = vperm.xlu0 %83, %v32
  %v85 = vpop.permute.xlu0 %84
  %88 = vset.pattern.permute.xlu0 0
  %89 = vperm.xlu0 %88, %v33
  %v90 = vpop.permute.xlu0 %89
  %93 = vset.pattern.permute.xlu0 0
  %94 = vperm.xlu0 %93, %v34
  %v95 = vpop.permute.xlu0 %94
  %98 = vset.pattern.permute.xlu0 0
  %99 = vperm.xlu0 %98, %v35
  %v100 = vpop.permute.xlu0 %99
  %103 = vset.pattern.permute.xlu0 0
  %104 = vperm.xlu0 %103, %v36
  %v105 = vpop.permute.xlu0 %104
  %108 = vset.pattern.permute.xlu0 0
  %109 = vperm.xlu0 %108, %v37
  %v110 = vpop.permute.xlu0 %109
  %113 = vset.pattern.permute.xlu0 0
  %114 = vperm.xlu0 %113, %v38
  %v115 = vpop.permute.xlu0 %114
  %118 = vset.pattern.permute.xlu0 0
  %119 = vperm.xlu0 %118, %v39
  %v120 = vpop.permute.xlu0 %119
  %123 = vset.pattern.permute.xlu0 0
  %124 = vperm.xlu0 %123, %v40
  %v125 = vpop.permute.xlu0 %124
  %v138 = vunpack.c.l.b16 %v61
  %v139 = vunpack.c.l.b16 %v62
  %v140 = vunpack.c.l.b16 %v63
  %v141 = vunpack.c.l.b16 %v64
  %v142 = vunpack.c.l.b16 %v65
  %v143 = vunpack.c.l.b16 %v66
  %v144 = vunpack.c.l.b16 %v67
  %v145 = vunpack.c.l.b16 %v68
  %v146 = vunpack.c.l.b16 %v69
  %v147 = vunpack.c.l.b16 %v70
  %v148 = vunpack.c.l.b16 %v71
  %v149 = vpack.c.b16 %v139, %v138
  %v150 = vpack.c.b16 %v141, %v140
  %v151 = vpack.c.b16 %v143, %v142
  %v152 = vpack.c.b16 %v145, %v144
  %v153 = vpack.c.b16 %v147, %v146
  %v154 = vpack.c.b16 %v148, %v148
  %vm155 = vcmask 113664
  %v157 = vsel %vm155, %v149, 0
  %v160 = vsel %vm155, %v150, 0
  %v163 = vsel %vm155, %v151, 0
  %v166 = vsel %vm155, %v152, 0
  %v169 = vsel %vm155, %v153, 0
  %v172 = vsel %vm155, %v154, 0
  %vm174 = vcmask 1046528
  %v176 = vsel %vm174, %v29, 0
  %178 = vmatprep.subr.bf16.mxu0 0
  %179 = vmatpush1.bf16.msra.mxu0 %v176
  %180 = vmatprep.subr.bf16.mxu0 0
  %181 = vmatpush1.bf16.msra.mxu0 0
  %182 = vmatprep.subr.bf16.mxu0 0
  %183 = vmatpush1.bf16.msra.mxu0 0
  %184 = vmatprep.subr.bf16.mxu0 0
  %185 = vmatpush1.bf16.msra.mxu0 0
  %186 = vmatprep.subr.bf16.mxu0 0
  %187 = vmatpush1.bf16.msra.mxu0 0
  %188 = vmatprep.subr.bf16.mxu0 0
  %189 = vmatpush1.bf16.msra.mxu0 0
  %190 = vmatprep.subr.bf16.mxu0 0
  %191 = vmatpush1.bf16.msra.mxu0 0
  %192 = vmatprep.subr.bf16.mxu0 0
  %193 = vmatpush1.bf16.msra.mxu0 0
  %194 = vmatprep.subr.bf16.mxu0 0
  %195 = vmatpush1.bf16.msra.mxu0 0
  %196 = vmatprep.subr.bf16.mxu0 0
  %197 = vmatpush1.bf16.msra.mxu0 0
  %198 = vmatprep.subr.bf16.mxu0 0
  %199 = vmatpush1.bf16.msra.mxu0 0
  %200 = vmatprep.subr.bf16.mxu0 0
  %201 = vmatpush1.bf16.msra.mxu0 0
  %202 = vmatprep.subr.bf16.mxu0 0
  %203 = vmatpush1.bf16.msra.mxu0 0
  %204 = vmatprep.subr.bf16.mxu0 0
  %205 = vmatpush1.bf16.msra.mxu0 0
  %206 = vmatprep.subr.bf16.mxu0 0
  %207 = vmatpush1.bf16.msra.mxu0 0
  %208 = vmatprep.subr.bf16.mxu0 0
  %209 = vmatpush1.bf16.msra.mxu0 0
  %210 = vmatprep.mubr.bf16.mxu0 0
  %211 = vmatmul.mubr.bf16.gmra.mrb[0].mxu0 %v157
  %v212 = vpop.f32.mrb[0].mxu0
  %v213 = vadd.f32 %v75, %v212
  %v214 = vpop.f32.mrb[0].mxu0
  %v215 = vpop.f32.mrb[0].mxu0
  %v216 = vadd.f32 %v80, %v215
  %v217 = vpop.f32.mrb[0].mxu0
  %218 = vmatprep.mubr.bf16.mxu0 0
  %219 = vmatmul.mubr.bf16.gmra.mrb[0].mxu0 %v160
  %v220 = vpop.f32.mrb[0].mxu0
  %v221 = vadd.f32 %v85, %v220
  %v222 = vpop.f32.mrb[0].mxu0
  %v223 = vpop.f32.mrb[0].mxu0
  %v224 = vadd.f32 %v90, %v223
  %v225 = vpop.f32.mrb[0].mxu0
  %226 = vmatprep.mubr.bf16.mxu0 0
  %227 = vmatmul.mubr.bf16.gmra.mrb[0].mxu0 %v163
  %v228 = vpop.f32.mrb[0].mxu0
  %v229 = vadd.f32 %v95, %v228
  %v230 = vpop.f32.mrb[0].mxu0
  %v231 = vpop.f32.mrb[0].mxu0
  %v232 = vadd.f32 %v100, %v231
  %v233 = vpop.f32.mrb[0].mxu0
  %234 = vmatprep.mubr.bf16.mxu0 0
  %235 = vmatmul.mubr.bf16.gmra.mrb[0].mxu0 %v166
  %v236 = vpop.f32.mrb[0].mxu0
  %v237 = vadd.f32 %v105, %v236
  %v238 = vpop.f32.mrb[0].mxu0
  %v239 = vpop.f32.mrb[0].mxu0
  %v240 = vadd.f32 %v110, %v239
  %v241 = vpop.f32.mrb[0].mxu0
  %242 = vmatprep.mubr.bf16.mxu0 0
  %243 = vmatmul.mubr.bf16.gmra.mrb[0].mxu0 %v169
  %v244 = vpop.f32.mrb[0].mxu0
  %v245 = vadd.f32 %v115, %v244
  %v246 = vpop.f32.mrb[0].mxu0
  %v247 = vpop.f32.mrb[0].mxu0
  %v248 = vadd.f32 %v120, %v247
  %v249 = vpop.f32.mrb[0].mxu0
  %250 = vmatprep.mubr.bf16.mxu0 0
  %251 = vmatmul.mubr.bf16.gmra.mrb[0].mxu0 %v172
  %v252 = vpop.f32.mrb[0].mxu0
  %v253 = vadd.f32 %v125, %v252
  %v254 = vpop.f32.mrb[0].mxu0
  %v255 = vpop.f32.mrb[0].mxu0
  %v256 = vpop.f32.mrb[0].mxu0
  %257 = vdwg.mxu0
  %v258 = vlaneseq
  %v259 = vshrl.u32 %v258, 7
  %v260 = vadd.s32 %v259, 8
  %v261 = vadd.s32 %v259, 16
  %v262 = vadd.s32 %v259, 24
  %v263 = vadd.s32 %v259, 32
  %v264 = vadd.s32 %v259, 40
  %v265 = vadd.s32 %v259, 48
  %v266 = vadd.s32 %v259, 56
  %v267 = vadd.s32 %v259, 64
  %v268 = vadd.s32 %v259, 72
  %v269 = vadd.s32 %v259, 80
  %vm270 = vcmp.lt.s32.totalorder %v259, 24
  %vm271 = vcmp.lt.s32.totalorder %v260, 24
  %vm272 = vcmp.lt.s32.totalorder %v261, 24
  %vm273 = vcmp.lt.s32.totalorder %v262, 24
  %vm274 = vcmp.lt.s32.totalorder %v263, 24
  %vm275 = vcmp.lt.s32.totalorder %v264, 24
  %vm276 = vcmp.lt.s32.totalorder %v265, 24
  %vm277 = vcmp.lt.s32.totalorder %v266, 24
  %vm278 = vcmp.lt.s32.totalorder %v267, 24
  %vm279 = vcmp.lt.s32.totalorder %v268, 24
  %vm280 = vcmp.lt.s32.totalorder %v269, 24
  %v281 = vmax.f32 %v213, 0.0
  %v282 = vmax.f32 %v216, 0.0
  %v283 = vmax.f32 %v221, 0.0
  %v284 = vmax.f32 %v224, 0.0
  %v285 = vmax.f32 %v229, 0.0
  %v286 = vmax.f32 %v232, 0.0
  %v287 = vmax.f32 %v237, 0.0
  %v288 = vmax.f32 %v240, 0.0
  %v289 = vmax.f32 %v245, 0.0
  %v290 = vmax.f32 %v248, 0.0
  %v291 = vmax.f32 %v253, 0.0
  %v292 = vtanh.pop %v213
  %v293 = vtanh.pop %v216
  %v294 = vtanh.pop %v221
  %v295 = vtanh.pop %v224
  %v296 = vtanh.pop %v229
  %v297 = vtanh.pop %v232
  %v298 = vtanh.pop %v237
  %v299 = vtanh.pop %v240
  %v300 = vtanh.pop %v245
  %v301 = vtanh.pop %v248
  %v302 = vtanh.pop %v253
  %v303 = vsel %vm270, %v281, %v292
  %v304 = vsel %vm271, %v282, %v293
  %v305 = vsel %vm272, %v283, %v294
  %v306 = vsel %vm273, %v284, %v295
  %v307 = vsel %vm274, %v285, %v296
  %v308 = vsel %vm275, %v286, %v297
  %v309 = vsel %vm276, %v287, %v298
  %v310 = vsel %vm277, %v288, %v299
  %v311 = vsel %vm278, %v289, %v300
  %v312 = vsel %vm279, %v290, %v301
  %v313 = vsel %vm280, %v291, %v302
  %v314 = vld [vmem:[%s2] sm:$0xf]
  %v315 = vld [vmem:[%s2 + $0x4] sm:$0xf]
  %v316 = vld [vmem:[%s2 + $0x8] sm:$0xf]
  %v317 = vld [vmem:[%s2 + $0xc] sm:$0xf]
  %v318 = vld [vmem:[%s2 + $0x10] sm:$0xf]
  %v319 = vld [vmem:[%s2 + $0x14] sm:$0xf]
  %v320 = vld [vmem:[%s2 + $0x18] sm:$0xf]
  %v321 = vld [vmem:[%s2 + $0x1c] sm:$0xf]
  %v322 = vld [vmem:[%s2 + $0x20] sm:$0xf]
  %v323 = vld [vmem:[%s2 + $0x24] sm:$0xf]
  %v324 = vld [vmem:[%s2 + $0x28] sm:$0xf]
  %v325 = vld [vmem:[%s2 + $0x2c] sm:$0xf]
  %v326 = vld [vmem:[%s2 + $0x30] sm:$0xf]
  %v327 = vld [vmem:[%s2 + $0x34] sm:$0xf]
  %v328 = vpack.c.bf16 %v304, %v303
  %v329 = vpack.c.bf16 %v306, %v305
  %v330 = vpack.c.bf16 %v308, %v307
  %v331 = vpack.c.bf16 %v310, %v309
  %v332 = vpack.c.bf16 %v312, %v311
  %v333 = vpack.c.bf16 %v313, %v313
  %335 = vset.pattern.permute.xlu0 0
  %336 = vperm.xlu0 %335, %v41
  %v337 = vpop.permute.xlu0 %336
  %340 = vset.pattern.permute.xlu0 0
  %341 = vperm.xlu0 %340, %v42
  %v342 = vpop.permute.xlu0 %341
  %345 = vset.pattern.permute.xlu0 0
  %346 = vperm.xlu0 %345, %v43
  %v347 = vpop.permute.xlu0 %346
  %350 = vset.pattern.permute.xlu0 0
  %351 = vperm.xlu0 %350, %v44
  %v352 = vpop.permute.xlu0 %351
  %355 = vset.pattern.permute.xlu0 0
  %356 = vperm.xlu0 %355, %v45
  %v357 = vpop.permute.xlu0 %356
  %360 = vset.pattern.permute.xlu0 0
  %361 = vperm.xlu0 %360, %v46
  %v362 = vpop.permute.xlu0 %361
  %365 = vset.pattern.permute.xlu0 0
  %366 = vperm.xlu0 %365, %v47
  %v367 = vpop.permute.xlu0 %366
  %370 = vset.pattern.permute.xlu0 0
  %371 = vperm.xlu0 %370, %v48
  %v372 = vpop.permute.xlu0 %371
  %375 = vset.pattern.permute.xlu0 0
  %376 = vperm.xlu0 %375, %v49
  %v377 = vpop.permute.xlu0 %376
  %380 = vset.pattern.permute.xlu0 0
  %381 = vperm.xlu0 %380, %v50
  %v382 = vpop.permute.xlu0 %381
  %385 = vset.pattern.permute.xlu0 0
  %386 = vperm.xlu0 %385, %v51
  %v387 = vpop.permute.xlu0 %386
  %390 = vset.pattern.permute.xlu0 0
  %391 = vperm.xlu0 %390, %v52
  %v392 = vpop.permute.xlu0 %391
  %395 = vset.pattern.permute.xlu0 0
  %396 = vperm.xlu0 %395, %v53
  %v397 = vpop.permute.xlu0 %396
  %400 = vset.pattern.permute.xlu0 0
  %401 = vperm.xlu0 %400, %v54
  %v402 = vpop.permute.xlu0 %401
  %v418 = vunpack.c.l.b16 %v314
  %v419 = vunpack.c.l.b16 %v315
  %v420 = vunpack.c.l.b16 %v316
  %v421 = vunpack.c.l.b16 %v317
  %v422 = vunpack.c.l.b16 %v318
  %v423 = vunpack.c.l.b16 %v319
  %v424 = vunpack.c.l.b16 %v320
  %v425 = vunpack.c.l.b16 %v321
  %v426 = vunpack.c.l.b16 %v322
  %v427 = vunpack.c.l.b16 %v323
  %v428 = vunpack.c.l.b16 %v324
  %v429 = vunpack.c.l.b16 %v325
  %v430 = vunpack.c.l.b16 %v326
  %v431 = vunpack.c.l.b16 %v327
  %v432 = vpack.c.b16 %v419, %v418
  %v433 = vpack.c.b16 %v421, %v420
  %v434 = vpack.c.b16 %v423, %v422
  %v435 = vpack.c.b16 %v425, %v424
  %v436 = vpack.c.b16 %v427, %v426
  %v437 = vpack.c.b16 %v429, %v428
  %v438 = vpack.c.b16 %v431, %v430
  %vm439 = vcmask 719872
  %v441 = vsel %vm439, %v432, 0
  %v444 = vsel %vm439, %v433, 0
  %v447 = vsel %vm439, %v434, 0
  %v450 = vsel %vm439, %v435, 0
  %v453 = vsel %vm439, %v436, 0
  %v456 = vsel %vm439, %v437, 0
  %v459 = vsel %vm439, %v438, 0
  %vm461 = vcmask 1043456
  %v463 = vsel %vm461, %v333, 0
  %465 = vmatprep.subr.bf16.mxu0 0
  %466 = vmatpush1.bf16.msra.mxu0 %v328
  %467 = vmatprep.subr.bf16.mxu0 0
  %468 = vmatpush1.bf16.msra.mxu0 %v329
  %469 = vmatprep.subr.bf16.mxu0 0
  %470 = vmatpush1.bf16.msra.mxu0 %v330
  %471 = vmatprep.subr.bf16.mxu0 0
  %472 = vmatpush1.bf16.msra.mxu0 %v331
  %473 = vmatprep.subr.bf16.mxu0 0
  %474 = vmatpush1.bf16.msra.mxu0 %v332
  %475 = vmatprep.subr.bf16.mxu0 0
  %476 = vmatpush1.bf16.msra.mxu0 %v463
  %477 = vmatprep.subr.bf16.mxu0 0
  %478 = vmatpush1.bf16.msra.mxu0 0
  %479 = vmatprep.subr.bf16.mxu0 0
  %480 = vmatpush1.bf16.msra.mxu0 0
  %481 = vmatprep.subr.bf16.mxu0 0
  %482 = vmatpush1.bf16.msra.mxu0 0
  %483 = vmatprep.subr.bf16.mxu0 0
  %484 = vmatpush1.bf16.msra.mxu0 0
  %485 = vmatprep.subr.bf16.mxu0 0
  %486 = vmatpush1.bf16.msra.mxu0 0
  %487 = vmatprep.subr.bf16.mxu0 0
  %488 = vmatpush1.bf16.msra.mxu0 0
  %489 = vmatprep.subr.bf16.mxu0 0
  %490 = vmatpush1.bf16.msra.mxu0 0
  %491 = vmatprep.subr.bf16.mxu0 0
  %492 = vmatpush1.bf16.msra.mxu0 0
  %493 = vmatprep.subr.bf16.mxu0 0
  %494 = vmatpush1.bf16.msra.mxu0 0
  %495 = vmatprep.subr.bf16.mxu0 0
  %496 = vmatpush1.bf16.msra.mxu0 0
  %497 = vmatprep.mubr.bf16.mxu0 0
  %498 = vmatmul.mubr.bf16.gmra.mrb[0].mxu0 %v441
  %v499 = vpop.f32.mrb[0].mxu0
  %v500 = vadd.f32 %v337, %v499
  %v501 = vpop.f32.mrb[0].mxu0
  %v502 = vpop.f32.mrb[0].mxu0
  %v503 = vadd.f32 %v342, %v502
  %v504 = vpop.f32.mrb[0].mxu0
  %505 = vmatprep.mubr.bf16.mxu0 0
  %506 = vmatmul.mubr.bf16.gmra.mrb[0].mxu0 %v444
  %v507 = vpop.f32.mrb[0].mxu0
  %v508 = vadd.f32 %v347, %v507
  %v509 = vpop.f32.mrb[0].mxu0
  %v510 = vpop.f32.mrb[0].mxu0
  %v511 = vadd.f32 %v352, %v510
  %v512 = vpop.f32.mrb[0].mxu0
  %513 = vmatprep.mubr.bf16.mxu0 0
  %514 = vmatmul.mubr.bf16.gmra.mrb[0].mxu0 %v447
  %v515 = vpop.f32.mrb[0].mxu0
  %v516 = vadd.f32 %v357, %v515
  %v517 = vpop.f32.mrb[0].mxu0
  %v518 = vpop.f32.mrb[0].mxu0
  %v519 = vadd.f32 %v362, %v518
  %v520 = vpop.f32.mrb[0].mxu0
  %521 = vmatprep.mubr.bf16.mxu0 0
  %522 = vmatmul.mubr.bf16.gmra.mrb[0].mxu0 %v450
  %v523 = vpop.f32.mrb[0].mxu0
  %v524 = vadd.f32 %v367, %v523
  %v525 = vpop.f32.mrb[0].mxu0
  %v526 = vpop.f32.mrb[0].mxu0
  %v527 = vadd.f32 %v372, %v526
  %v528 = vpop.f32.mrb[0].mxu0
  %529 = vmatprep.mubr.bf16.mxu0 0
  %530 = vmatmul.mubr.bf16.gmra.mrb[0].mxu0 %v453
  %v531 = vpop.f32.mrb[0].mxu0
  %v532 = vadd.f32 %v377, %v531
  %v533 = vpop.f32.mrb[0].mxu0
  %v534 = vpop.f32.mrb[0].mxu0
  %v535 = vadd.f32 %v382, %v534
  %v536 = vpop.f32.mrb[0].mxu0
  %537 = vmatprep.mubr.bf16.mxu0 0
  %538 = vmatmul.mubr.bf16.gmra.mrb[0].mxu0 %v456
  %v539 = vpop.f32.mrb[0].mxu0
  %v540 = vadd.f32 %v387, %v539
  %v541 = vpop.f32.mrb[0].mxu0
  %v542 = vpop.f32.mrb[0].mxu0
  %v543 = vadd.f32 %v392, %v542
  %v544 = vpop.f32.mrb[0].mxu0
  %545 = vmatprep.mubr.bf16.mxu0 0
  %546 = vmatmul.mubr.bf16.gmra.mrb[0].mxu0 %v459
  %v547 = vpop.f32.mrb[0].mxu0
  %v548 = vadd.f32 %v397, %v547
  %v549 = vpop.f32.mrb[0].mxu0
  %v550 = vpop.f32.mrb[0].mxu0
  %v551 = vadd.f32 %v402, %v550
  %v552 = vpop.f32.mrb[0].mxu0
  %553 = vdwg.mxu0
  %v554 = vadd.s32 %v259, 88
  %v555 = vadd.s32 %v259, 96
  %v556 = vadd.s32 %v259, 104
  %vm557 = vcmp.lt.s32.totalorder %v259, 48
  %vm558 = vcmp.lt.s32.totalorder %v260, 48
  %vm559 = vcmp.lt.s32.totalorder %v261, 48
  %vm560 = vcmp.lt.s32.totalorder %v262, 48
  %vm561 = vcmp.lt.s32.totalorder %v263, 48
  %vm562 = vcmp.lt.s32.totalorder %v264, 48
  %vm563 = vcmp.lt.s32.totalorder %v265, 48
  %vm564 = vcmp.lt.s32.totalorder %v266, 48
  %vm565 = vcmp.lt.s32.totalorder %v267, 48
  %vm566 = vcmp.lt.s32.totalorder %v268, 48
  %vm567 = vcmp.lt.s32.totalorder %v269, 48
  %vm568 = vcmp.lt.s32.totalorder %v554, 48
  %vm569 = vcmp.lt.s32.totalorder %v555, 48
  %vm570 = vcmp.lt.s32.totalorder %v556, 48
  %v571 = vmax.f32 %v500, 0.0
  %v572 = vmax.f32 %v503, 0.0
  %v573 = vmax.f32 %v508, 0.0
  %v574 = vmax.f32 %v511, 0.0
  %v575 = vmax.f32 %v516, 0.0
  %v576 = vmax.f32 %v519, 0.0
  %v577 = vmax.f32 %v524, 0.0
  %v578 = vmax.f32 %v527, 0.0
  %v579 = vmax.f32 %v532, 0.0
  %v580 = vmax.f32 %v535, 0.0
  %v581 = vmax.f32 %v540, 0.0
  %v582 = vmax.f32 %v543, 0.0
  %v583 = vmax.f32 %v548, 0.0
  %v584 = vmax.f32 %v551, 0.0
  %v585 = vtanh.pop %v500
  %v586 = vtanh.pop %v503
  %v587 = vtanh.pop %v508
  %v588 = vtanh.pop %v511
  %v589 = vtanh.pop %v516
  %v590 = vtanh.pop %v519
  %v591 = vtanh.pop %v524
  %v592 = vtanh.pop %v527
  %v593 = vtanh.pop %v532
  %v594 = vtanh.pop %v535
  %v595 = vtanh.pop %v540
  %v596 = vtanh.pop %v543
  %v597 = vtanh.pop %v548
  %v598 = vtanh.pop %v551
  %v599 = vsel %vm557, %v571, %v585
  %v600 = vsel %vm558, %v572, %v586
  %v601 = vsel %vm559, %v573, %v587
  %v602 = vsel %vm560, %v574, %v588
  %v603 = vsel %vm561, %v575, %v589
  %v604 = vsel %vm562, %v576, %v590
  %v605 = vsel %vm563, %v577, %v591
  %v606 = vsel %vm564, %v578, %v592
  %v607 = vsel %vm565, %v579, %v593
  %v608 = vsel %vm566, %v580, %v594
  %v609 = vsel %vm567, %v581, %v595
  %v610 = vsel %vm568, %v582, %v596
  %v611 = vsel %vm569, %v583, %v597
  %v612 = vsel %vm570, %v584, %v598
  %v613 = vld [vmem:[%s3] sm:$0xf]
  %v614 = vld [vmem:[%s3 + $0x4] sm:$0xf]
  %v615 = vld [vmem:[%s3 + $0x8] sm:$0xf]
  %v616 = vld [vmem:[%s3 + $0xc] sm:$0x1]
  %v617 = vpack.c.bf16 %v600, %v599
  %v618 = vpack.c.bf16 %v602, %v601
  %v619 = vpack.c.bf16 %v604, %v603
  %v620 = vpack.c.bf16 %v606, %v605
  %v621 = vpack.c.bf16 %v608, %v607
  %v622 = vpack.c.bf16 %v610, %v609
  %v623 = vpack.c.bf16 %v612, %v611
  %625 = vset.pattern.permute.xlu0 0
  %626 = vperm.xlu0 %625, %v55
  %v627 = vpop.permute.xlu0 %626
  %630 = vset.pattern.permute.xlu0 0
  %631 = vperm.xlu0 %630, %v56
  %v632 = vpop.permute.xlu0 %631
  %635 = vset.pattern.permute.xlu0 0
  %636 = vperm.xlu0 %635, %v57
  %v637 = vpop.permute.xlu0 %636
  %640 = vset.pattern.permute.xlu0 0
  %641 = vperm.xlu0 %640, %v58
  %v642 = vpop.permute.xlu0 %641
  %v648 = vunpack.c.l.b16 %v613
  %v649 = vunpack.c.l.b16 %v614
  %v650 = vunpack.c.l.b16 %v615
  %v651 = vunpack.c.l.b16 %v616
  %v652 = vpack.c.b16 %v649, %v648
  %v653 = vpack.c.b16 %v651, %v650
  %vm654 = vcmask 916480
  %v656 = vsel %vm654, %v652, 0
  %v659 = vsel %vm654, %v653, 0
  %661 = vmatprep.subr.bf16.mxu0 0
  %662 = vmatpush1.bf16.msra.mxu0 %v617
  %663 = vmatprep.subr.bf16.mxu0 0
  %664 = vmatpush1.bf16.msra.mxu0 %v618
  %665 = vmatprep.subr.bf16.mxu0 0
  %666 = vmatpush1.bf16.msra.mxu0 %v619
  %667 = vmatprep.subr.bf16.mxu0 0
  %668 = vmatpush1.bf16.msra.mxu0 %v620
  %669 = vmatprep.subr.bf16.mxu0 0
  %670 = vmatpush1.bf16.msra.mxu0 %v621
  %671 = vmatprep.subr.bf16.mxu0 0
  %672 = vmatpush1.bf16.msra.mxu0 %v622
  %673 = vmatprep.subr.bf16.mxu0 0
  %674 = vmatpush1.bf16.msra.mxu0 %v623
  %675 = vmatprep.subr.bf16.mxu0 0
  %676 = vmatpush1.bf16.msra.mxu0 0
  %677 = vmatprep.subr.bf16.mxu0 0
  %678 = vmatpush1.bf16.msra.mxu0 0
  %679 = vmatprep.subr.bf16.mxu0 0
  %680 = vmatpush1.bf16.msra.mxu0 0
  %681 = vmatprep.subr.bf16.mxu0 0
  %682 = vmatpush1.bf16.msra.mxu0 0
  %683 = vmatprep.subr.bf16.mxu0 0
  %684 = vmatpush1.bf16.msra.mxu0 0
  %685 = vmatprep.subr.bf16.mxu0 0
  %686 = vmatpush1.bf16.msra.mxu0 0
  %687 = vmatprep.subr.bf16.mxu0 0
  %688 = vmatpush1.bf16.msra.mxu0 0
  %689 = vmatprep.subr.bf16.mxu0 0
  %690 = vmatpush1.bf16.msra.mxu0 0
  %691 = vmatprep.subr.bf16.mxu0 0
  %692 = vmatpush1.bf16.msra.mxu0 0
  %693 = vmatprep.mubr.bf16.mxu0 0
  %694 = vmatmul.mubr.bf16.gmra.mrb[0].mxu0 %v656
  %v695 = vpop.f32.mrb[0].mxu0
  %v696 = vadd.f32 %v627, %v695
  %v697 = vpop.f32.mrb[0].mxu0
  %v698 = vpop.f32.mrb[0].mxu0
  %v699 = vadd.f32 %v632, %v698
  %v700 = vpop.f32.mrb[0].mxu0
  %701 = vmatprep.mubr.bf16.mxu0 0
  %702 = vmatmul.mubr.bf16.gmra.mrb[0].mxu0 %v659
  %v703 = vpop.f32.mrb[0].mxu0
  %v704 = vadd.f32 %v637, %v703
  %v705 = vpop.f32.mrb[0].mxu0
  %v706 = vpop.f32.mrb[0].mxu0
  %v707 = vadd.f32 %v642, %v706
  %v708 = vpop.f32.mrb[0].mxu0
  %709 = vdwg.mxu0
  %v710 = vmax.f32 %v696, 0.0
  %v711 = vmax.f32 %v699, 0.0
  %v712 = vmax.f32 %v704, 0.0
  %v713 = vmax.f32 %v707, 0.0
  %v714 = vsel %vm270, %v710, %v696
  %v715 = vsel %vm271, %v711, %v699
  %v716 = vsel %vm272, %v712, %v704
  %v717 = vsel %vm273, %v713, %v707
  %v718 = vld [vmem:[%s4] sm:$0x3]
  %v719 = vpack.c.bf16 %v715, %v714
  %v720 = vpack.c.bf16 %v717, %v716
  %722 = vset.pattern.permute.xlu0 0
  %723 = vperm.xlu0 %722, %v59
  %v724 = vpop.permute.xlu0 %723
  %vm726 = vcmask 203776
  %v728 = vsel %vm726, %v718, 0
  %vm730 = vcmask 1044480
  %v731 = vsel %vm461, 4294967295, 65535
  %v732 = vsel %vm730, %v731, 0
  %v734 = vand.u32 %v720, %v732
  %736 = vmatprep.subr.bf16.mxu0 0
  %737 = vmatpush1.bf16.msra.mxu0 %v719
  %738 = vmatprep.subr.bf16.mxu0 0
  %739 = vmatpush1.bf16.msra.mxu0 %v734
  %740 = vmatprep.subr.bf16.mxu0 0
  %741 = vmatpush1.bf16.msra.mxu0 0
  %742 = vmatprep.subr.bf16.mxu0 0
  %743 = vmatpush1.bf16.msra.mxu0 0
  %744 = vmatprep.subr.bf16.mxu0 0
  %745 = vmatpush1.bf16.msra.mxu0 0
  %746 = vmatprep.subr.bf16.mxu0 0
  %747 = vmatpush1.bf16.msra.mxu0 0
  %748 = vmatprep.subr.bf16.mxu0 0
  %749 = vmatpush1.bf16.msra.mxu0 0
  %750 = vmatprep.subr.bf16.mxu0 0
  %751 = vmatpush1.bf16.msra.mxu0 0
  %752 = vmatprep.subr.bf16.mxu0 0
  %753 = vmatpush1.bf16.msra.mxu0 0
  %754 = vmatprep.subr.bf16.mxu0 0
  %755 = vmatpush1.bf16.msra.mxu0 0
  %756 = vmatprep.subr.bf16.mxu0 0
  %757 = vmatpush1.bf16.msra.mxu0 0
  %758 = vmatprep.subr.bf16.mxu0 0
  %759 = vmatpush1.bf16.msra.mxu0 0
  %760 = vmatprep.subr.bf16.mxu0 0
  %761 = vmatpush1.bf16.msra.mxu0 0
  %762 = vmatprep.subr.bf16.mxu0 0
  %763 = vmatpush1.bf16.msra.mxu0 0
  %764 = vmatprep.subr.bf16.mxu0 0
  %765 = vmatpush1.bf16.msra.mxu0 0
  %766 = vmatprep.subr.bf16.mxu0 0
  %767 = vmatpush1.bf16.msra.mxu0 0
  %768 = vmatprep.mubr.bf16.mxu0 0
  %769 = vmatmul.mubr.bf16.gmra.mrb[0].mxu0 %v728
  %v770 = vpop.f32.mrb[0].mxu0
  %v771 = vadd.f32 %v724, %v770
  %v772 = vpop.f32.mrb[0].mxu0
  %v773 = vpop.f32.mrb[0].mxu0
  %v774 = vpop.f32.mrb[0].mxu0
  %775 = vdwg.mxu0
  %v777 = vrot.slane %v771, 6
  %v779 = vsub.f32 %v28, %v777
  %v780 = vmul.f32 %v779, %v779
  %v782 = vrot.slane %v780, 2
  %v785 = vrot.slane %v717, 4
  %v787 = vsel %vm461, %v782, %v785
  %v788 = vld [vmem:[%s5] sm:$0x3]
  %790 = vset.pattern.permute.xlu0 0
  %791 = vperm.xlu0 %790, %v60
  %v792 = vpop.permute.xlu0 %791
  %vm794 = vcmask 39936
  %v796 = vsel %vm794, %v788, 0
  %v799 = vsel %vm730, %v787, 0
  %801 = vmatprep.subr.mxu0 0.0
  %802 = vmatpush1.msra.mxu0 %v799
  %803 = vmatprep.subr.mxu0 0.0
  %804 = vmatpush1.msra.mxu0 0.0
  %805 = vmatprep.subr.mxu0 0.0
  %806 = vmatpush1.msra.mxu0 0.0
  %807 = vmatprep.subr.mxu0 0.0
  %808 = vmatpush1.msra.mxu0 0.0
  %809 = vmatprep.subr.mxu0 0.0
  %810 = vmatpush1.msra.mxu0 0.0
  %811 = vmatprep.subr.mxu0 0.0
  %812 = vmatpush1.msra.mxu0 0.0
  %813 = vmatprep.subr.mxu0 0.0
  %814 = vmatpush1.msra.mxu0 0.0
  %815 = vmatprep.subr.mxu0 0.0
  %816 = vmatpush1.msra.mxu0 0.0
  %817 = vmatprep.subr.mxu0 0.0
  %818 = vmatpush1.msra.mxu0 0.0
  %819 = vmatprep.subr.mxu0 0.0
  %820 = vmatpush1.msra.mxu0 0.0
  %821 = vmatprep.subr.mxu0 0.0
  %822 = vmatpush1.msra.mxu0 0.0
  %823 = vmatprep.subr.mxu0 0.0
  %824 = vmatpush1.msra.mxu0 0.0
  %825 = vmatprep.subr.mxu0 0.0
  %826 = vmatpush1.msra.mxu0 0.0
  %827 = vmatprep.subr.mxu0 0.0
  %828 = vmatpush1.msra.mxu0 0.0
  %829 = vmatprep.subr.mxu0 0.0
  %830 = vmatpush1.msra.mxu0 0.0
  %831 = vmatprep.subr.mxu0 0.0
  %832 = vmatpush1.msra.mxu0 0.0
  %833 = vmatprep.subr.mxu0 0.0
  %834 = vmatpush1.msra.mxu0 0.0
  %835 = vmatprep.subr.mxu0 0.0
  %836 = vmatpush1.msra.mxu0 0.0
  %837 = vmatprep.subr.mxu0 0.0
  %838 = vmatpush1.msra.mxu0 0.0
  %839 = vmatprep.subr.mxu0 0.0
  %840 = vmatpush1.msra.mxu0 0.0
  %841 = vmatprep.subr.mxu0 0.0
  %842 = vmatpush1.msra.mxu0 0.0
  %843 = vmatprep.subr.mxu0 0.0
  %844 = vmatpush1.msra.mxu0 0.0
  %845 = vmatprep.subr.mxu0 0.0
  %846 = vmatpush1.msra.mxu0 0.0
  %847 = vmatprep.subr.mxu0 0.0
  %848 = vmatpush1.msra.mxu0 0.0
  %849 = vmatprep.subr.mxu0 0.0
  %850 = vmatpush1.msra.mxu0 0.0
  %851 = vmatprep.subr.mxu0 0.0
  %852 = vmatpush1.msra.mxu0 0.0
  %853 = vmatprep.subr.mxu0 0.0
  %854 = vmatpush1.msra.mxu0 0.0
  %855 = vmatprep.subr.mxu0 0.0
  %856 = vmatpush1.msra.mxu0 0.0
  %857 = vmatprep.subr.mxu0 0.0
  %858 = vmatpush1.msra.mxu0 0.0
  %859 = vmatprep.subr.mxu0 0.0
  %860 = vmatpush1.msra.mxu0 0.0
  %861 = vmatprep.subr.mxu0 0.0
  %862 = vmatpush1.msra.mxu0 0.0
  %863 = vmatprep.subr.mxu0 0.0
  %864 = vmatpush1.msra.mxu0 0.0
  %865 = vmatprep.mubr.f32.mxu0 0.0
  %866 = vmatmul.mubr.f32.gmra.mrb[0].mxu0 %v796
  %v867 = vpop.f32.mrb[0].mxu0
  %v868 = vadd.f32 %v792, %v867
  %v869 = vpop.f32.mrb[0].mxu0
  %870 = vdwg.mxu0
  %vm871 = vcmask 58368
  %872 = vst.msk [vmem:[%s7] sm:$0x3] %vm871, %v868
  // Predicated region
  $region30: #{actor_critic_evaluate.1} parent=0 // pred_check
    _
  $region31: #{actor_critic_evaluate.1} parent=0 // pred_check_branch
    %874 = sbr.rel (0) target = $region33
  $region32: #{actor_critic_evaluate.1} parent=0 // pred_region
    _
  $region33: #{actor_critic_evaluate.1} parent=0 // pred_fallthru
    _
  // Predicated region
  $region34: #{actor_critic_evaluate.1} parent=0 // pred_check
    _
  $region35: #{actor_critic_evaluate.1} parent=0 // pred_check_branch
    %876 = sbr.rel (0) target = $region37
  $region36: #{actor_critic_evaluate.1} parent=0 // pred_region
    _
  $region37: #{actor_critic_evaluate.1} parent=0 // pred_fallthru
    _

</llo_original>
